<compile_context>
chip_gen: v6e
topology: v6e:2x2x1
jax: 0.10.0
libtpu: 0.0.40
codegen_flags: <defaults>
</compile_context>

<pallas_src>
import jax
import jax.numpy as jnp
from jax.experimental import pallas as pl
from jax.experimental.pallas import tpu as pltpu

HIDDEN = 256          # base layer width (fixed by the PyTorch module)
HEAD_PAD = 128        # fused policy+value head padded to one full lane group
TB_MAX = 1024         # max batch-tile rows (working set ~2.5 MB << scoped VMEM)
SMALL_BATCH_XLA = 64  # below this, plain XLA beats kernel launch + weight DMA


def a3c_kernel(x_ref, w1_ref, wh_ref, b_ref, out_ref):
    # b_ref is (1, HIDDEN + HEAD_PAD): [ b1 | bp | bv | zero-pad ]
    # Hidden layer: ReLU(x @ W1 + b1)   -- MXU matmul + VPU max, f32 accumulate
    h = jnp.dot(x_ref[...], w1_ref[...], preferred_element_type=jnp.float32)
    h = jnp.maximum(h + b_ref[:, :HIDDEN], 0.0)

    # Fused policy+value head: h @ [Wp | Wv | 0] + [bp | bv | 0]
    # Single MXU push, single lane-dense (tb, 128) store.
    out_ref[...] = (
        jnp.dot(h, wh_ref[...], preferred_element_type=jnp.float32)
        + b_ref[:, HIDDEN:]
    ).astype(out_ref.dtype)


def pack_params(params):
    """Pack torch-shaped weights into kernel layout. Call ONCE per weight
    update (not per forward step) -- the packing cost and the re-upload of the
    128 KB fused head weight are then amortized across rollout steps."""
    act_size = params["wp"].shape[0]
    assert act_size + 1 <= HEAD_PAD
    # Base layer: torch (out, in) -> (in, out)
    w1 = jnp.asarray(params["w1"], jnp.float32).T                 # [obs, 256]
    # Fused head weight: [Wp.T | Wv.T | zeros] -> [256, HEAD_PAD]
    wh = jnp.zeros((HIDDEN, HEAD_PAD), jnp.float32)
    wh = wh.at[:, :act_size].set(jnp.asarray(params["wp"], jnp.float32).T)
    wh = wh.at[:, act_size:act_size + 1].set(jnp.asarray(params["wv"], jnp.float32).T)
    # All biases packed into one lane-aligned row: [b1 | bp | bv | zeros]
    b_all = jnp.zeros((1, HIDDEN + HEAD_PAD), jnp.float32)
    b_all = b_all.at[0, :HIDDEN].set(jnp.asarray(params["b1"], jnp.float32))
    b_all = b_all.at[0, HIDDEN:HIDDEN + act_size].set(jnp.asarray(params["bp"], jnp.float32))
    b_all = b_all.at[0, HIDDEN + act_size].set(jnp.asarray(params["bv"], jnp.float32)[0])
    return {"w1": w1, "wh": wh, "b_all": b_all, "act_size": act_size}


def _round_up(n, m):
    return pl.cdiv(n, m) * m


def a3c_forward(x, packed, tb_max=TB_MAX):
    """x: [B, obs_size] float32. packed: output of pack_params.

    Returns (policy [B, act_size], value [B, 1]).
    """
    B, obs_size = x.shape
    act_size = packed["act_size"]
    w1, wh, b_all = packed["w1"], packed["wh"], packed["b_all"]

    # ---- tiny-batch fallback: plain XLA is as fast or faster ---------------
    if B <= SMALL_BATCH_XLA:
        h = jnp.maximum(x @ w1 + b_all[:, :HIDDEN], 0.0)
        out = h @ wh + b_all[:, HIDDEN:]
        return out[:, :act_size], out[:, act_size:act_size + 1]

    # ---- batch tiling -------------------------------------------------------
    # Goal: 1 grid step for typical batches (per-step overhead ~0.35 us is the
    # binding cost at ~9 MFLOPs), but keep the grid a multiple of 2 for larger
    # batches so v7x's two TensorCores both get work via the parallel axis.
    n_tiles = pl.cdiv(B, tb_max)
    if B > 512:
        n_tiles = max(n_tiles, 2)
    if n_tiles > 1 and n_tiles % 2:
        n_tiles += 1
    tb = _round_up(pl.cdiv(B, n_tiles), 8)
    b_pad = n_tiles * tb
    if b_pad != B:
        x = jnp.pad(x, ((0, b_pad - B), (0, 0)))
    grid = (n_tiles,)

    flops = 2 * b_pad * (obs_size * HIDDEN + HIDDEN * HEAD_PAD)
    bytes_accessed = 4 * (
        b_pad * obs_size            # x
        + obs_size * HIDDEN         # w1
        + HIDDEN * HEAD_PAD         # wh
        + (HIDDEN + HEAD_PAD)       # biases
        + b_pad * HEAD_PAD          # output slab
    )

    out = pl.pallas_call(
        a3c_kernel,
        out_shape=jax.ShapeDtypeStruct((b_pad, HEAD_PAD), jnp.float32),
        grid=grid,
        in_specs=[
            # Only x streams with the grid; weights/biases stay VMEM-resident.
            pl.BlockSpec((tb, obs_size), lambda i: (i, 0)),
            pl.BlockSpec((obs_size, HIDDEN), lambda i: (0, 0)),
            pl.BlockSpec((HIDDEN, HEAD_PAD), lambda i: (0, 0)),
            pl.BlockSpec((1, HIDDEN + HEAD_PAD), lambda i: (0, 0)),
        ],
        out_specs=pl.BlockSpec((tb, HEAD_PAD), lambda i: (i, 0)),
        compiler_params=pltpu.CompilerParams(
            dimension_semantics=("parallel",),
        ),
        cost_estimate=pl.CostEstimate(
            flops=flops, transcendentals=0, bytes_accessed=bytes_accessed),
    )(x, w1, wh, b_all)

    # TODO(synk): for rollout-sized batches, consider a bf16 (or act_size+1
    # wide) output slab to cut the ~25x HBM write amplification of HEAD_PAD.
    policy = out[:B, :act_size]
    value = out[:B, act_size:act_size + 1]
    return policy, value


def init_params(key, obs_size, act_size, hidden=HIDDEN):
    """Deterministic PyTorch-style uniform(-1/sqrt(fan_in), 1/sqrt(fan_in)) init."""
    keys = jax.random.split(key, 6)

    def u(k, shape, fan_in):
        bound = 1.0 / jnp.sqrt(jnp.float32(fan_in))
        return jax.random.uniform(k, shape, jnp.float32, -bound, bound)

    return {
        "w1": u(keys[0], (hidden, obs_size), obs_size),
        "b1": u(keys[1], (hidden,), obs_size),
        "wp": u(keys[2], (act_size, hidden), hidden),
        "bp": u(keys[3], (act_size,), hidden),
        "wv": u(keys[4], (1, hidden), hidden),
        "bv": u(keys[5], (1,), hidden),
    }


def a3c_reference(x, params):
    h = jnp.maximum(x @ params["w1"].T + params["b1"], 0.0)
    return h @ params["wp"].T + params["bp"], h @ params["wv"].T + params["bv"]


if __name__ == "__main__":
    # LunarLander-v2: obs=8, actions=4.
    obs_size, act_size = 8, 4

    key = jax.random.PRNGKey(0)
    k_x, k_p = jax.random.split(key)
    params = init_params(k_p, obs_size, act_size)
    packed = pack_params(params)  # once per parameter update

    # Medium batch: single grid step (tb = 256).
    batch = 256
    x = jax.random.normal(k_x, (batch, obs_size), jnp.float32)
    policy, value = a3c_forward(x, packed)
    jax.block_until_ready((policy, value))

    ref_policy, ref_value = a3c_reference(x, params)
    assert policy.shape == (batch, act_size) and value.shape == (batch, 1)
    assert jnp.allclose(policy, ref_policy, atol=1e-5, rtol=1e-5)
    assert jnp.allclose(value, ref_value, atol=1e-5, rtol=1e-5)

    # Tiny batch: XLA fallback path.
    x_small = x[:5]
    p_s, v_s = a3c_forward(x_small, packed)
    jax.block_until_ready((p_s, v_s))
    assert jnp.allclose(p_s, ref_policy[:5], atol=1e-5, rtol=1e-5)
    assert jnp.allclose(v_s, ref_value[:5], atol=1e-5, rtol=1e-5)

    # Larger batch: 2-tile parallel grid (v7x dual-TC path; 1 TC elsewhere).
    batch_big = 600
    x_big = jax.random.normal(jax.random.PRNGKey(1), (batch_big, obs_size), jnp.float32)
    p_b, v_b = a3c_forward(x_big, packed)
    jax.block_until_ready((p_b, v_b))
    ref_pb, ref_vb = a3c_reference(x_big, params)
    assert p_b.shape == (batch_big, act_size) and v_b.shape == (batch_big, 1)
    assert jnp.allclose(p_b, ref_pb, atol=1e-5, rtol=1e-5)
    assert jnp.allclose(v_b, ref_vb, atol=1e-5, rtol=1e-5)

    print("KERNEL_OK")
</pallas_src>

<mosaic_0001>
module attributes {stable_mosaic.version = 11 : i64} {
  func.func @a3c_kernel(%arg0: i32, %arg1: memref<256x8xf32, #tpu.memory_space<vmem>>, %arg2: memref<8x256xf32, #tpu.memory_space<vmem>>, %arg3: memref<256x128xf32, #tpu.memory_space<vmem>>, %arg4: memref<1x384xf32, #tpu.memory_space<vmem>>, %arg5: memref<256x128xf32, #tpu.memory_space<vmem>>) attributes {dimension_semantics = [#tpu.dimension_semantics<parallel>], iteration_bounds = array<i64: 1>, scalar_prefetch = 0 : i64, scratch_operands = 0 : i64, tpu.core_type = #tpu.core_type<tc>, window_params = [{transform_indices = @transform_0, window_bounds = array<i64: 256, 8>}, {pipeline_mode = #tpu.pipeline_mode<synchronous>, transform_indices = @transform_1, window_bounds = array<i64: 8, 256>}, {pipeline_mode = #tpu.pipeline_mode<synchronous>, transform_indices = @transform_2, window_bounds = array<i64: 256, 128>}, {pipeline_mode = #tpu.pipeline_mode<synchronous>, transform_indices = @transform_3, window_bounds = array<i64: 1, 384>}, {transform_indices = @transform_4, window_bounds = array<i64: 256, 128>}]} {
    %c0 = arith.constant 0 : index
    %c0_0 = arith.constant 0 : index
    %0 = vector.load %arg1[%c0, %c0_0] : memref<256x8xf32, #tpu.memory_space<vmem>>, vector<256x8xf32>
    %c0_1 = arith.constant 0 : index
    %c0_2 = arith.constant 0 : index
    %1 = vector.load %arg2[%c0_1, %c0_2] : memref<8x256xf32, #tpu.memory_space<vmem>>, vector<8x256xf32>
    %cst = arith.constant dense<0.000000e+00> : vector<256x256xf32>
    %2 = tpu.matmul %0, %1, %cst {dimension_numbers = #tpu.dot_dimension_numbers<[1], [0], [0], [1], [0, 0, 1, 1], [], []>} : vector<256x8xf32>, vector<8x256xf32>, vector<256x256xf32> -> vector<256x256xf32>
    %c0_3 = arith.constant 0 : index
    %c0_4 = arith.constant 0 : index
    %3 = vector.load %arg4[%c0_3, %c0_4] : memref<1x384xf32, #tpu.memory_space<vmem>>, vector<1x256xf32>
    %4 = vector.broadcast %3 : vector<1x256xf32> to vector<256x256xf32>
    %5 = arith.addf %2, %4 : vector<256x256xf32>
    %cst_5 = arith.constant 0.000000e+00 : f32
    %6 = vector.broadcast %cst_5 : f32 to vector<256x256xf32>
    %7 = arith.maximumf %5, %6 : vector<256x256xf32>
    %c0_6 = arith.constant 0 : index
    %c0_7 = arith.constant 0 : index
    %8 = vector.load %arg3[%c0_6, %c0_7] : memref<256x128xf32, #tpu.memory_space<vmem>>, vector<256x128xf32>
    %cst_8 = arith.constant dense<0.000000e+00> : vector<256x128xf32>
    %9 = tpu.matmul %7, %8, %cst_8 {dimension_numbers = #tpu.dot_dimension_numbers<[1], [0], [0], [1], [0, 0, 1, 1], [], []>} : vector<256x256xf32>, vector<256x128xf32>, vector<256x128xf32> -> vector<256x128xf32>
    %c0_9 = arith.constant 0 : index
    %c256 = arith.constant 256 : index
    %10 = vector.load %arg4[%c0_9, %c256] : memref<1x384xf32, #tpu.memory_space<vmem>>, vector<1x128xf32>
    %11 = vector.broadcast %10 : vector<1x128xf32> to vector<256x128xf32>
    %12 = arith.addf %9, %11 : vector<256x128xf32>
    %c0_10 = arith.constant 0 : index
    %c0_11 = arith.constant 0 : index
    %13 = vector.load %arg5[%c0_10, %c0_11] : memref<256x128xf32, #tpu.memory_space<vmem>>, vector<256x128xf32>
    tpu.vector_store %arg5[%c0_10, %c0_11], %12 {strides = array<i32>} : memref<256x128xf32, #tpu.memory_space<vmem>>, vector<256x128xf32>,
    return
  }
  func.func @transform_0(%arg0: i32) -> (i32, i32) {
    %c0_i32 = arith.constant 0 : i32
    %c0_i32_0 = arith.constant 0 : i32
    return %arg0, %c0_i32 : i32, i32
  }
  func.func @transform_1(%arg0: i32) -> (i32, i32) {
    %c0_i32 = arith.constant 0 : i32
    %c0_i32_0 = arith.constant 0 : i32
    %c0_i32_1 = arith.constant 0 : i32
    return %c0_i32, %c0_i32_0 : i32, i32
  }
  func.func @transform_2(%arg0: i32) -> (i32, i32) {
    %c0_i32 = arith.constant 0 : i32
    %c0_i32_0 = arith.constant 0 : i32
    %c0_i32_1 = arith.constant 0 : i32
    return %c0_i32, %c0_i32_0 : i32, i32
  }
  func.func @transform_3(%arg0: i32) -> (i32, i32) {
    %c0_i32 = arith.constant 0 : i32
    %c0_i32_0 = arith.constant 0 : i32
    %c0_i32_1 = arith.constant 0 : i32
    return %c0_i32, %c0_i32_0 : i32, i32
  }
  func.func @transform_4(%arg0: i32) -> (i32, i32) {
    %c0_i32 = arith.constant 0 : i32
    %c0_i32_0 = arith.constant 0 : i32
    return %arg0, %c0_i32 : i32, i32
  }
}

</mosaic_0001>

<llo_original>
// kernel: tpu_custom_call.1
$region0: #{tpu_custom_call.1}
  #allocation0 [shape = 'u32[]', space=smem, size = 0x4, offset = 0x4, fixed_abs, tag = 'smem constant byte address 0x4 - core index']
  #allocation1 [shape = 'u32[144,128]{1,0:T(1,128)}', space=vmem, size = 0x12000, scoped, tag = 'internal scratch']
  %s0 = inlined_call_operand.vmem [shape: f32[256,8], index: 0, kind: input, shape index: {}]
  %s1 = inlined_call_operand.vmem [shape: f32[8,256], index: 1, kind: input, shape index: {}]
  %s2 = inlined_call_operand.vmem [shape: f32[256,128], index: 2, kind: input, shape index: {}]
  %s3 = inlined_call_operand.vmem [shape: f32[1,384], index: 3, kind: input, shape index: {}]
  %s4 = inlined_call_operand.hbm [shape: f32[256,128], index: 4, kind: output, shape index: {}]
  %s5 = sld [smem:[#allocation0]]
  $region26: #{tpu_custom_call.1} parent=0
    _
  %s7 = ssub.s32 1, %s5
  %s8 = scalar_select 0, %s7, %s5
  $region1: #{tpu_custom_call.1} parent=0
    #allocation2 [shape = 'u8[131072]{0}', space=vmem, size = 0x20000, scoped, tag = 'output window, operand 0, single buffered']
    #allocation3 [shape = 's32[1]{0}', space=sflag, size = 0x4, scoped, tag = 'scoped memory for tpu_custom_call.1']
    %9 = vsyncpa [#allocation3], 0
    // Predicated region
    $region2: #{tpu_custom_call.1} parent=1 // pred_check
      _
    $region3: #{tpu_custom_call.1} parent=1 // pred_check_branch
      %11 = sbr.rel (0) target = $region5
    $region4: #{tpu_custom_call.1} parent=1 // pred_region
      _
    $region5: #{tpu_custom_call.1} parent=1 // pred_fallthru
      _
    // Predicated region
    $region6: #{tpu_custom_call.1} parent=1 // pred_check
      _
    $region7: #{tpu_custom_call.1} parent=1 // pred_check_branch
      %13 = sbr.rel (0) target = $region9
    $region8: #{tpu_custom_call.1} parent=1 // pred_region
      _
    $region9: #{tpu_custom_call.1} parent=1 // pred_fallthru
      _
    // Predicated region
    $region10: #{tpu_custom_call.1} parent=1 // pred_check
      _
    $region11: #{tpu_custom_call.1} parent=1 // pred_check_branch
      %15 = sbr.rel (0) target = $region13
    $region12: #{tpu_custom_call.1} parent=1 // pred_region
      _
    $region13: #{tpu_custom_call.1} parent=1 // pred_fallthru
      _
    // Predicated region
    $region14: #{tpu_custom_call.1} parent=1 // pred_check
      _
    $region15: #{tpu_custom_call.1} parent=1 // pred_check_branch
      %17 = sbr.rel (0) target = $region17
    $region16: #{tpu_custom_call.1} parent=1 // pred_region
      _
    $region17: #{tpu_custom_call.1} parent=1 // pred_fallthru
      _
    %v18 = vld [vmem:[%s0] sm:$0xff]
    %v19 = vld [vmem:[%s0 + $0x8] sm:$0xff]
    %v20 = vld [vmem:[%s0 + $0x10] sm:$0xff]
    %v21 = vld [vmem:[%s0 + $0x18] sm:$0xff]
    %v22 = vld [vmem:[%s0 + $0x20] sm:$0xff]
    %v23 = vld [vmem:[%s0 + $0x28] sm:$0xff]
    %v24 = vld [vmem:[%s0 + $0x30] sm:$0xff]
    %v25 = vld [vmem:[%s0 + $0x38] sm:$0xff]
    %v26 = vld [vmem:[%s0 + $0x40] sm:$0xff]
    %v27 = vld [vmem:[%s0 + $0x48] sm:$0xff]
    %v28 = vld [vmem:[%s0 + $0x50] sm:$0xff]
    %v29 = vld [vmem:[%s0 + $0x58] sm:$0xff]
    %v30 = vld [vmem:[%s0 + $0x60] sm:$0xff]
    %v31 = vld [vmem:[%s0 + $0x68] sm:$0xff]
    %v32 = vld [vmem:[%s0 + $0x70] sm:$0xff]
    %v33 = vld [vmem:[%s0 + $0x78] sm:$0xff]
    %v34 = vld [vmem:[%s0 + $0x80] sm:$0xff]
    %v35 = vld [vmem:[%s0 + $0x88] sm:$0xff]
    %v36 = vld [vmem:[%s0 + $0x90] sm:$0xff]
    %v37 = vld [vmem:[%s0 + $0x98] sm:$0xff]
    %v38 = vld [vmem:[%s0 + $0xa0] sm:$0xff]
    %v39 = vld [vmem:[%s0 + $0xa8] sm:$0xff]
    %v40 = vld [vmem:[%s0 + $0xb0] sm:$0xff]
    %v41 = vld [vmem:[%s0 + $0xb8] sm:$0xff]
    %v42 = vld [vmem:[%s0 + $0xc0] sm:$0xff]
    %v43 = vld [vmem:[%s0 + $0xc8] sm:$0xff]
    %v44 = vld [vmem:[%s0 + $0xd0] sm:$0xff]
    %v45 = vld [vmem:[%s0 + $0xd8] sm:$0xff]
    %v46 = vld [vmem:[%s0 + $0xe0] sm:$0xff]
    %v47 = vld [vmem:[%s0 + $0xe8] sm:$0xff]
    %v48 = vld [vmem:[%s0 + $0xf0] sm:$0xff]
    %v49 = vld [vmem:[%s0 + $0xf8] sm:$0xff]
    %v50 = vld [vmem:[%s1] sm:$0xff]
    %v51 = vld [vmem:[%s1 + $0x8] sm:$0xff]
    %v52 = vld [vmem:[%s3] sm:$0x3]
    %v54 = vlaneseq
    %v55 = vshrl.u32 %v54, 7
    %v56 = vsub.s32 0, %v55
    %v57 = vrot.slane %v52, %v56
    %v58 = vlaneseq
    %v59 = vshrl.u32 %v58, 7
    %v60 = vsub.s32 1, %v59
    %v61 = vrot.slane %v52, %v60
    %vm64 = vcmask 64512
    %v66 = vsel %vm64, %v18, 0
    %v69 = vsel %vm64, %v19, 0
    %v72 = vsel %vm64, %v20, 0
    %v75 = vsel %vm64, %v21, 0
    %v78 = vsel %vm64, %v22, 0
    %v81 = vsel %vm64, %v23, 0
    %v84 = vsel %vm64, %v24, 0
    %v87 = vsel %vm64, %v25, 0
    %v90 = vsel %vm64, %v26, 0
    %v93 = vsel %vm64, %v27, 0
    %v96 = vsel %vm64, %v28, 0
    %v99 = vsel %vm64, %v29, 0
    %v102 = vsel %vm64, %v30, 0
    %v105 = vsel %vm64, %v31, 0
    %v108 = vsel %vm64, %v32, 0
    %v111 = vsel %vm64, %v33, 0
    %v114 = vsel %vm64, %v34, 0
    %v117 = vsel %vm64, %v35, 0
    %v120 = vsel %vm64, %v36, 0
    %v123 = vsel %vm64, %v37, 0
    %v126 = vsel %vm64, %v38, 0
    %v129 = vsel %vm64, %v39, 0
    %v132 = vsel %vm64, %v40, 0
    %v135 = vsel %vm64, %v41, 0
    %v138 = vsel %vm64, %v42, 0
    %v141 = vsel %vm64, %v43, 0
    %v144 = vsel %vm64, %v44, 0
    %v147 = vsel %vm64, %v45, 0
    %v150 = vsel %vm64, %v46, 0
    %v153 = vsel %vm64, %v47, 0
    %v156 = vsel %vm64, %v48, 0
    %v159 = vsel %vm64, %v49, 0
    %161 = vmatprep.subr.mxu0 0.0
    %162 = vmatpush1.msra.mxu0 0.0
    %163 = vmatprep.subr.mxu0 0.0
    %164 = vmatpush1.msra.mxu0 0.0
    %165 = vmatprep.subr.mxu0 0.0
    %166 = vmatpush1.msra.mxu0 0.0
    %167 = vmatprep.subr.mxu0 0.0
    %168 = vmatpush1.msra.mxu0 0.0
    %169 = vmatprep.subr.mxu0 0.0
    %170 = vmatpush1.msra.mxu0 0.0
    %171 = vmatprep.subr.mxu0 0.0
    %172 = vmatpush1.msra.mxu0 0.0
    %173 = vmatprep.subr.mxu0 0.0
    %174 = vmatpush1.msra.mxu0 0.0
    %175 = vmatprep.subr.mxu0 0.0
    %176 = vmatpush1.msra.mxu0 0.0
    %177 = vmatprep.subr.mxu0 0.0
    %178 = vmatpush1.msra.mxu0 0.0
    %179 = vmatprep.subr.mxu0 0.0
    %180 = vmatpush1.msra.mxu0 0.0
    %181 = vmatprep.subr.mxu0 0.0
    %182 = vmatpush1.msra.mxu0 0.0
    %183 = vmatprep.subr.mxu0 0.0
    %184 = vmatpush1.msra.mxu0 0.0
    %185 = vmatprep.subr.mxu0 0.0
    %186 = vmatpush1.msra.mxu0 0.0
    %187 = vmatprep.subr.mxu0 0.0
    %188 = vmatpush1.msra.mxu0 0.0
    %189 = vmatprep.subr.mxu0 0.0
    %190 = vmatpush1.msra.mxu0 0.0
    %191 = vmatprep.subr.mxu0 %v51
    %192 = vmatpush1.msra.mxu0 %v50
    %193 = vmatprep.subr.mxu0 0.0
    %194 = vmatpush2.msra.mxu0 0.0
    %195 = vmatprep.subr.mxu0 0.0
    %196 = vmatpush2.msra.mxu0 0.0
    %197 = vmatprep.subr.mxu0 0.0
    %198 = vmatpush2.msra.mxu0 0.0
    %199 = vmatprep.subr.mxu0 0.0
    %200 = vmatpush2.msra.mxu0 0.0
    %201 = vmatprep.subr.mxu0 0.0
    %202 = vmatpush2.msra.mxu0 0.0
    %203 = vmatprep.subr.mxu0 0.0
    %204 = vmatpush2.msra.mxu0 0.0
    %205 = vmatprep.subr.mxu0 0.0
    %206 = vmatpush2.msra.mxu0 0.0
    %207 = vmatprep.subr.mxu0 0.0
    %208 = vmatpush2.msra.mxu0 0.0
    %209 = vmatprep.subr.mxu0 0.0
    %210 = vmatpush2.msra.mxu0 0.0
    %211 = vmatprep.subr.mxu0 0.0
    %212 = vmatpush2.msra.mxu0 0.0
    %213 = vmatprep.subr.mxu0 0.0
    %214 = vmatpush2.msra.mxu0 0.0
    %215 = vmatprep.subr.mxu0 0.0
    %216 = vmatpush2.msra.mxu0 0.0
    %217 = vmatprep.subr.mxu0 0.0
    %218 = vmatpush2.msra.mxu0 0.0
    %219 = vmatprep.subr.mxu0 0.0
    %220 = vmatpush2.msra.mxu0 0.0
    %221 = vmatprep.subr.mxu0 0.0
    %222 = vmatpush2.msra.mxu0 0.0
    %223 = vmatprep.subr.mxu0 0.0
    %224 = vmatpush2.msra.mxu0 0.0
    %225 = vmatprep.mubr.f32.mxu0 0.0
    %226 = vmatmul.mubr.f32.gmra.mxu0 %v66
    %v227 = vpop.f32.mrf.mxu0
    %v228 = vadd.f32 %v57, %v227
    %v229 = vpop.f32.mrf.mxu0
    %v230 = vadd.f32 %v61, %v229
    %231 = vmatprep.mubr.f32.mxu0 0.0
    %232 = vmatmul.mubr.f32.gmra.mxu0 %v69
    %v233 = vpop.f32.mrf.mxu0
    %v234 = vadd.f32 %v57, %v233
    %v235 = vpop.f32.mrf.mxu0
    %v236 = vadd.f32 %v61, %v235
    %237 = vmatprep.mubr.f32.mxu0 0.0
    %238 = vmatmul.mubr.f32.gmra.mxu0 %v72
    %v239 = vpop.f32.mrf.mxu0
    %v240 = vadd.f32 %v57, %v239
    %v241 = vpop.f32.mrf.mxu0
    %v242 = vadd.f32 %v61, %v241
    %243 = vmatprep.mubr.f32.mxu0 0.0
    %244 = vmatmul.mubr.f32.gmra.mxu0 %v75
    %v245 = vpop.f32.mrf.mxu0
    %v246 = vadd.f32 %v57, %v245
    %v247 = vpop.f32.mrf.mxu0
    %v248 = vadd.f32 %v61, %v247
    %249 = vmatprep.mubr.f32.mxu0 0.0
    %250 = vmatmul.mubr.f32.gmra.mxu0 %v78
    %v251 = vpop.f32.mrf.mxu0
    %v252 = vadd.f32 %v57, %v251
    %v253 = vpop.f32.mrf.mxu0
    %v254 = vadd.f32 %v61, %v253
    %255 = vmatprep.mubr.f32.mxu0 0.0
    %256 = vmatmul.mubr.f32.gmra.mxu0 %v81
    %v257 = vpop.f32.mrf.mxu0
    %v258 = vadd.f32 %v57, %v257
    %v259 = vpop.f32.mrf.mxu0
    %v260 = vadd.f32 %v61, %v259
    %261 = vmatprep.mubr.f32.mxu0 0.0
    %262 = vmatmul.mubr.f32.gmra.mxu0 %v84
    %v263 = vpop.f32.mrf.mxu0
    %v264 = vadd.f32 %v57, %v263
    %v265 = vpop.f32.mrf.mxu0
    %v266 = vadd.f32 %v61, %v265
    %267 = vmatprep.mubr.f32.mxu0 0.0
    %268 = vmatmul.mubr.f32.gmra.mxu0 %v87
    %v269 = vpop.f32.mrf.mxu0
    %v270 = vadd.f32 %v57, %v269
    %v271 = vpop.f32.mrf.mxu0
    %v272 = vadd.f32 %v61, %v271
    %273 = vmatprep.mubr.f32.mxu0 0.0
    %274 = vmatmul.mubr.f32.gmra.mxu0 %v90
    %v275 = vpop.f32.mrf.mxu0
    %v276 = vadd.f32 %v57, %v275
    %v277 = vpop.f32.mrf.mxu0
    %v278 = vadd.f32 %v61, %v277
    %279 = vmatprep.mubr.f32.mxu0 0.0
    %280 = vmatmul.mubr.f32.gmra.mxu0 %v93
    %v281 = vpop.f32.mrf.mxu0
    %v282 = vadd.f32 %v57, %v281
    %v283 = vpop.f32.mrf.mxu0
    %v284 = vadd.f32 %v61, %v283
    %285 = vmatprep.mubr.f32.mxu0 0.0
    %286 = vmatmul.mubr.f32.gmra.mxu0 %v96
    %v287 = vpop.f32.mrf.mxu0
    %v288 = vadd.f32 %v57, %v287
    %v289 = vpop.f32.mrf.mxu0
    %v290 = vadd.f32 %v61, %v289
    %291 = vmatprep.mubr.f32.mxu0 0.0
    %292 = vmatmul.mubr.f32.gmra.mxu0 %v99
    %v293 = vpop.f32.mrf.mxu0
    %v294 = vadd.f32 %v57, %v293
    %v295 = vpop.f32.mrf.mxu0
    %v296 = vadd.f32 %v61, %v295
    %297 = vmatprep.mubr.f32.mxu0 0.0
    %298 = vmatmul.mubr.f32.gmra.mxu0 %v102
    %v299 = vpop.f32.mrf.mxu0
    %v300 = vadd.f32 %v57, %v299
    %v301 = vpop.f32.mrf.mxu0
    %v302 = vadd.f32 %v61, %v301
    %303 = vmatprep.mubr.f32.mxu0 0.0
    %304 = vmatmul.mubr.f32.gmra.mxu0 %v105
    %v305 = vpop.f32.mrf.mxu0
    %v306 = vadd.f32 %v57, %v305
    %v307 = vpop.f32.mrf.mxu0
    %v308 = vadd.f32 %v61, %v307
    %309 = vmatprep.mubr.f32.mxu0 0.0
    %310 = vmatmul.mubr.f32.gmra.mxu0 %v108
    %v311 = vpop.f32.mrf.mxu0
    %v312 = vadd.f32 %v57, %v311
    %v313 = vpop.f32.mrf.mxu0
    %v314 = vadd.f32 %v61, %v313
    %315 = vmatprep.mubr.f32.mxu0 0.0
    %316 = vmatmul.mubr.f32.gmra.mxu0 %v111
    %v317 = vpop.f32.mrf.mxu0
    %v318 = vadd.f32 %v57, %v317
    %v319 = vpop.f32.mrf.mxu0
    %v320 = vadd.f32 %v61, %v319
    %321 = vmatprep.mubr.f32.mxu0 0.0
    %322 = vmatmul.mubr.f32.gmra.mxu0 %v114
    %v323 = vpop.f32.mrf.mxu0
    %v324 = vadd.f32 %v57, %v323
    %v325 = vpop.f32.mrf.mxu0
    %v326 = vadd.f32 %v61, %v325
    %327 = vmatprep.mubr.f32.mxu0 0.0
    %328 = vmatmul.mubr.f32.gmra.mxu0 %v117
    %v329 = vpop.f32.mrf.mxu0
    %v330 = vadd.f32 %v57, %v329
    %v331 = vpop.f32.mrf.mxu0
    %v332 = vadd.f32 %v61, %v331
    %333 = vmatprep.mubr.f32.mxu0 0.0
    %334 = vmatmul.mubr.f32.gmra.mxu0 %v120
    %v335 = vpop.f32.mrf.mxu0
    %v336 = vadd.f32 %v57, %v335
    %v337 = vpop.f32.mrf.mxu0
    %v338 = vadd.f32 %v61, %v337
    %339 = vmatprep.mubr.f32.mxu0 0.0
    %340 = vmatmul.mubr.f32.gmra.mxu0 %v123
    %v341 = vpop.f32.mrf.mxu0
    %v342 = vadd.f32 %v57, %v341
    %v343 = vpop.f32.mrf.mxu0
    %v344 = vadd.f32 %v61, %v343
    %345 = vmatprep.mubr.f32.mxu0 0.0
    %346 = vmatmul.mubr.f32.gmra.mxu0 %v126
    %v347 = vpop.f32.mrf.mxu0
    %v348 = vadd.f32 %v57, %v347
    %v349 = vpop.f32.mrf.mxu0
    %v350 = vadd.f32 %v61, %v349
    %351 = vmatprep.mubr.f32.mxu0 0.0
    %352 = vmatmul.mubr.f32.gmra.mxu0 %v129
    %v353 = vpop.f32.mrf.mxu0
    %v354 = vadd.f32 %v57, %v353
    %v355 = vpop.f32.mrf.mxu0
    %v356 = vadd.f32 %v61, %v355
    %357 = vmatprep.mubr.f32.mxu0 0.0
    %358 = vmatmul.mubr.f32.gmra.mxu0 %v132
    %v359 = vpop.f32.mrf.mxu0
    %v360 = vadd.f32 %v57, %v359
    %v361 = vpop.f32.mrf.mxu0
    %v362 = vadd.f32 %v61, %v361
    %363 = vmatprep.mubr.f32.mxu0 0.0
    %364 = vmatmul.mubr.f32.gmra.mxu0 %v135
    %v365 = vpop.f32.mrf.mxu0
    %v366 = vadd.f32 %v57, %v365
    %v367 = vpop.f32.mrf.mxu0
    %v368 = vadd.f32 %v61, %v367
    %369 = vmatprep.mubr.f32.mxu0 0.0
    %370 = vmatmul.mubr.f32.gmra.mxu0 %v138
    %v371 = vpop.f32.mrf.mxu0
    %v372 = vadd.f32 %v57, %v371
    %v373 = vpop.f32.mrf.mxu0
    %v374 = vadd.f32 %v61, %v373
    %375 = vmatprep.mubr.f32.mxu0 0.0
    %376 = vmatmul.mubr.f32.gmra.mxu0 %v141
    %v377 = vpop.f32.mrf.mxu0
    %v378 = vadd.f32 %v57, %v377
    %v379 = vpop.f32.mrf.mxu0
    %v380 = vadd.f32 %v61, %v379
    %381 = vmatprep.mubr.f32.mxu0 0.0
    %382 = vmatmul.mubr.f32.gmra.mxu0 %v144
    %v383 = vpop.f32.mrf.mxu0
    %v384 = vadd.f32 %v57, %v383
    %v385 = vpop.f32.mrf.mxu0
    %v386 = vadd.f32 %v61, %v385
    %387 = vmatprep.mubr.f32.mxu0 0.0
    %388 = vmatmul.mubr.f32.gmra.mxu0 %v147
    %v389 = vpop.f32.mrf.mxu0
    %v390 = vadd.f32 %v57, %v389
    %v391 = vpop.f32.mrf.mxu0
    %v392 = vadd.f32 %v61, %v391
    %393 = vmatprep.mubr.f32.mxu0 0.0
    %394 = vmatmul.mubr.f32.gmra.mxu0 %v150
    %v395 = vpop.f32.mrf.mxu0
    %v396 = vadd.f32 %v57, %v395
    %v397 = vpop.f32.mrf.mxu0
    %v398 = vadd.f32 %v61, %v397
    %399 = vmatprep.mubr.f32.mxu0 0.0
    %400 = vmatmul.mubr.f32.gmra.mxu0 %v153
    %v401 = vpop.f32.mrf.mxu0
    %v402 = vadd.f32 %v57, %v401
    %v403 = vpop.f32.mrf.mxu0
    %v404 = vadd.f32 %v61, %v403
    %405 = vmatprep.mubr.f32.mxu0 0.0
    %406 = vmatmul.mubr.f32.gmra.mxu0 %v156
    %v407 = vpop.f32.mrf.mxu0
    %v408 = vadd.f32 %v57, %v407
    %v409 = vpop.f32.mrf.mxu0
    %v410 = vadd.f32 %v61, %v409
    %411 = vmatprep.mubr.f32.mxu0 0.0
    %412 = vmatmul.mubr.f32.gmra.mxu0 %v159
    %v413 = vpop.f32.mrf.mxu0
    %v414 = vadd.f32 %v57, %v413
    %v415 = vpop.f32.mrf.mxu0
    %v416 = vadd.f32 %v61, %v415
    %417 = vdwg.mxu0
    %v418 = vmax.f32 %v228, 0.0
    %v419 = vmax.f32 %v230, 0.0
    %v420 = vmax.f32 %v234, 0.0
    %v421 = vmax.f32 %v236, 0.0
    %v422 = vmax.f32 %v240, 0.0
    %v423 = vmax.f32 %v242, 0.0
    %v424 = vmax.f32 %v246, 0.0
    %v425 = vmax.f32 %v248, 0.0
    %v426 = vmax.f32 %v252, 0.0
    %v427 = vmax.f32 %v254, 0.0
    %v428 = vmax.f32 %v258, 0.0
    %v429 = vmax.f32 %v260, 0.0
    %v430 = vmax.f32 %v264, 0.0
    %v431 = vmax.f32 %v266, 0.0
    %v432 = vmax.f32 %v270, 0.0
    %v433 = vmax.f32 %v272, 0.0
    %v434 = vmax.f32 %v276, 0.0
    %v435 = vmax.f32 %v278, 0.0
    %v436 = vmax.f32 %v282, 0.0
    %v437 = vmax.f32 %v284, 0.0
    %v438 = vmax.f32 %v288, 0.0
    %v439 = vmax.f32 %v290, 0.0
    %v440 = vmax.f32 %v294, 0.0
    %v441 = vmax.f32 %v296, 0.0
    %v442 = vmax.f32 %v300, 0.0
    %v443 = vmax.f32 %v302, 0.0
    %v444 = vmax.f32 %v306, 0.0
    %v445 = vmax.f32 %v308, 0.0
    %v446 = vmax.f32 %v312, 0.0
    %v447 = vmax.f32 %v314, 0.0
    %v448 = vmax.f32 %v318, 0.0
    %v449 = vmax.f32 %v320, 0.0
    %v450 = vmax.f32 %v324, 0.0
    %v451 = vmax.f32 %v326, 0.0
    %v452 = vmax.f32 %v330, 0.0
    %v453 = vmax.f32 %v332, 0.0
    %v454 = vmax.f32 %v336, 0.0
    %v455 = vmax.f32 %v338, 0.0
    %v456 = vmax.f32 %v342, 0.0
    %v457 = vmax.f32 %v344, 0.0
    %v458 = vmax.f32 %v348, 0.0
    %v459 = vmax.f32 %v350, 0.0
    %v460 = vmax.f32 %v354, 0.0
    %v461 = vmax.f32 %v356, 0.0
    %v462 = vmax.f32 %v360, 0.0
    %v463 = vmax.f32 %v362, 0.0
    %v464 = vmax.f32 %v366, 0.0
    %v465 = vmax.f32 %v368, 0.0
    %v466 = vmax.f32 %v372, 0.0
    %v467 = vmax.f32 %v374, 0.0
    %v468 = vmax.f32 %v378, 0.0
    %v469 = vmax.f32 %v380, 0.0
    %v470 = vmax.f32 %v384, 0.0
    %v471 = vmax.f32 %v386, 0.0
    %v472 = vmax.f32 %v390, 0.0
    %v473 = vmax.f32 %v392, 0.0
    %v474 = vmax.f32 %v396, 0.0
    %v475 = vmax.f32 %v398, 0.0
    %v476 = vmax.f32 %v402, 0.0
    %v477 = vmax.f32 %v404, 0.0
    %v478 = vmax.f32 %v408, 0.0
    %v479 = vmax.f32 %v410, 0.0
    %v480 = vmax.f32 %v414, 0.0
    %v481 = vmax.f32 %v416, 0.0
    %v482 = vld [vmem:[%s2] sm:$0xff]
    %v483 = vld [vmem:[%s2 + $0x8] sm:$0xff]
    %v484 = vld [vmem:[%s2 + $0x10] sm:$0xff]
    %v485 = vld [vmem:[%s2 + $0x18] sm:$0xff]
    %v486 = vld [vmem:[%s2 + $0x20] sm:$0xff]
    %v487 = vld [vmem:[%s2 + $0x28] sm:$0xff]
    %v488 = vld [vmem:[%s2 + $0x30] sm:$0xff]
    %v489 = vld [vmem:[%s2 + $0x38] sm:$0xff]
    %v490 = vld [vmem:[%s2 + $0x40] sm:$0xff]
    %v491 = vld [vmem:[%s2 + $0x48] sm:$0xff]
    %v492 = vld [vmem:[%s2 + $0x50] sm:$0xff]
    %v493 = vld [vmem:[%s2 + $0x58] sm:$0xff]
    %v494 = vld [vmem:[%s2 + $0x60] sm:$0xff]
    %v495 = vld [vmem:[%s2 + $0x68] sm:$0xff]
    %v496 = vld [vmem:[%s2 + $0x70] sm:$0xff]
    %v497 = vld [vmem:[%s2 + $0x78] sm:$0xff]
    %v498 = vld [vmem:[%s2 + $0x80] sm:$0xff]
    %v499 = vld [vmem:[%s2 + $0x88] sm:$0xff]
    %v500 = vld [vmem:[%s2 + $0x90] sm:$0xff]
    %v501 = vld [vmem:[%s2 + $0x98] sm:$0xff]
    %v502 = vld [vmem:[%s2 + $0xa0] sm:$0xff]
    %v503 = vld [vmem:[%s2 + $0xa8] sm:$0xff]
    %v504 = vld [vmem:[%s2 + $0xb0] sm:$0xff]
    %v505 = vld [vmem:[%s2 + $0xb8] sm:$0xff]
    %v506 = vld [vmem:[%s2 + $0xc0] sm:$0xff]
    %v507 = vld [vmem:[%s2 + $0xc8] sm:$0xff]
    %v508 = vld [vmem:[%s2 + $0xd0] sm:$0xff]
    %v509 = vld [vmem:[%s2 + $0xd8] sm:$0xff]
    %v510 = vld [vmem:[%s2 + $0xe0] sm:$0xff]
    %v511 = vld [vmem:[%s2 + $0xe8] sm:$0xff]
    %v512 = vld [vmem:[%s2 + $0xf0] sm:$0xff]
    %v513 = vld [vmem:[%s2 + $0xf8] sm:$0xff]
    %v514 = vld [vmem:[%s3 + $0x2] sm:$0x1]
    %v516 = vlaneseq
    %v517 = vshrl.u32 %v516, 7
    %v518 = vsub.s32 0, %v517
    %v519 = vrot.slane %v514, %v518
    %521 = vmatprep.subr.mxu0 0.0
    %522 = vmatpush1.msra.mxu0 %v497
    %523 = vmatprep.subr.mxu0 0.0
    %524 = vmatpush1.msra.mxu0 %v496
    %525 = vmatprep.subr.mxu0 0.0
    %526 = vmatpush1.msra.mxu0 %v495
    %527 = vmatprep.subr.mxu0 0.0
    %528 = vmatpush1.msra.mxu0 %v494
    %529 = vmatprep.subr.mxu0 0.0
    %530 = vmatpush1.msra.mxu0 %v493
    %531 = vmatprep.subr.mxu0 0.0
    %532 = vmatpush1.msra.mxu0 %v492
    %533 = vmatprep.subr.mxu0 0.0
    %534 = vmatpush1.msra.mxu0 %v491
    %535 = vmatprep.subr.mxu0 0.0
    %536 = vmatpush1.msra.mxu0 %v490
    %537 = vmatprep.subr.mxu0 0.0
    %538 = vmatpush1.msra.mxu0 %v489
    %539 = vmatprep.subr.mxu0 0.0
    %540 = vmatpush1.msra.mxu0 %v488
    %541 = vmatprep.subr.mxu0 0.0
    %542 = vmatpush1.msra.mxu0 %v487
    %543 = vmatprep.subr.mxu0 0.0
    %544 = vmatpush1.msra.mxu0 %v486
    %545 = vmatprep.subr.mxu0 0.0
    %546 = vmatpush1.msra.mxu0 %v485
    %547 = vmatprep.subr.mxu0 0.0
    %548 = vmatpush1.msra.mxu0 %v484
    %549 = vmatprep.subr.mxu0 0.0
    %550 = vmatpush1.msra.mxu0 %v483
    %551 = vmatprep.subr.mxu0 0.0
    %552 = vmatpush1.msra.mxu0 %v482
    %553 = vmatprep.subr.mxu0 0.0
    %554 = vmatpush2.msra.mxu0 %v513
    %555 = vmatprep.subr.mxu0 0.0
    %556 = vmatpush2.msra.mxu0 %v512
    %557 = vmatprep.subr.mxu0 0.0
    %558 = vmatpush2.msra.mxu0 %v511
    %559 = vmatprep.subr.mxu0 0.0
    %560 = vmatpush2.msra.mxu0 %v510
    %561 = vmatprep.subr.mxu0 0.0
    %562 = vmatpush2.msra.mxu0 %v509
    %563 = vmatprep.subr.mxu0 0.0
    %564 = vmatpush2.msra.mxu0 %v508
    %565 = vmatprep.subr.mxu0 0.0
    %566 = vmatpush2.msra.mxu0 %v507
    %567 = vmatprep.subr.mxu0 0.0
    %568 = vmatpush2.msra.mxu0 %v506
    %569 = vmatprep.subr.mxu0 0.0
    %570 = vmatpush2.msra.mxu0 %v505
    %571 = vmatprep.subr.mxu0 0.0
    %572 = vmatpush2.msra.mxu0 %v504
    %573 = vmatprep.subr.mxu0 0.0
    %574 = vmatpush2.msra.mxu0 %v503
    %575 = vmatprep.subr.mxu0 0.0
    %576 = vmatpush2.msra.mxu0 %v502
    %577 = vmatprep.subr.mxu0 0.0
    %578 = vmatpush2.msra.mxu0 %v501
    %579 = vmatprep.subr.mxu0 0.0
    %580 = vmatpush2.msra.mxu0 %v500
    %581 = vmatprep.subr.mxu0 0.0
    %582 = vmatpush2.msra.mxu0 %v499
    %583 = vmatprep.subr.mxu0 0.0
    %584 = vmatpush2.msra.mxu0 %v498
    %585 = vmatprep.mubr.f32.mxu0 %v419
    %586 = vmatmul.mubr.f32.gmra.mxu0 %v418
    %v587 = vpop.f32.mrf.mxu0
    %v588 = vadd.f32 %v519, %v587
    %v589 = vpop.f32.mrf.mxu0
    %590 = vmatprep.mubr.f32.mxu0 %v421
    %591 = vmatmul.mubr.f32.gmra.mxu0 %v420
    %v592 = vpop.f32.mrf.mxu0
    %v593 = vadd.f32 %v519, %v592
    %v594 = vpop.f32.mrf.mxu0
    %595 = vmatprep.mubr.f32.mxu0 %v423
    %596 = vmatmul.mubr.f32.gmra.mxu0 %v422
    %v597 = vpop.f32.mrf.mxu0
    %v598 = vadd.f32 %v519, %v597
    %v599 = vpop.f32.mrf.mxu0
    %600 = vmatprep.mubr.f32.mxu0 %v425
    %601 = vmatmul.mubr.f32.gmra.mxu0 %v424
    %v602 = vpop.f32.mrf.mxu0
    %v603 = vadd.f32 %v519, %v602
    %v604 = vpop.f32.mrf.mxu0
    %605 = vmatprep.mubr.f32.mxu0 %v427
    %606 = vmatmul.mubr.f32.gmra.mxu0 %v426
    %v607 = vpop.f32.mrf.mxu0
    %v608 = vadd.f32 %v519, %v607
    %v609 = vpop.f32.mrf.mxu0
    %610 = vmatprep.mubr.f32.mxu0 %v429
    %611 = vmatmul.mubr.f32.gmra.mxu0 %v428
    %v612 = vpop.f32.mrf.mxu0
    %v613 = vadd.f32 %v519, %v612
    %v614 = vpop.f32.mrf.mxu0
    %615 = vmatprep.mubr.f32.mxu0 %v431
    %616 = vmatmul.mubr.f32.gmra.mxu0 %v430
    %v617 = vpop.f32.mrf.mxu0
    %v618 = vadd.f32 %v519, %v617
    %v619 = vpop.f32.mrf.mxu0
    %620 = vmatprep.mubr.f32.mxu0 %v433
    %621 = vmatmul.mubr.f32.gmra.mxu0 %v432
    %v622 = vpop.f32.mrf.mxu0
    %v623 = vadd.f32 %v519, %v622
    %v624 = vpop.f32.mrf.mxu0
    %625 = vmatprep.mubr.f32.mxu0 %v435
    %626 = vmatmul.mubr.f32.gmra.mxu0 %v434
    %v627 = vpop.f32.mrf.mxu0
    %v628 = vadd.f32 %v519, %v627
    %v629 = vpop.f32.mrf.mxu0
    %630 = vmatprep.mubr.f32.mxu0 %v437
    %631 = vmatmul.mubr.f32.gmra.mxu0 %v436
    %v632 = vpop.f32.mrf.mxu0
    %v633 = vadd.f32 %v519, %v632
    %v634 = vpop.f32.mrf.mxu0
    %635 = vmatprep.mubr.f32.mxu0 %v439
    %636 = vmatmul.mubr.f32.gmra.mxu0 %v438
    %v637 = vpop.f32.mrf.mxu0
    %v638 = vadd.f32 %v519, %v637
    %v639 = vpop.f32.mrf.mxu0
    %640 = vmatprep.mubr.f32.mxu0 %v441
    %641 = vmatmul.mubr.f32.gmra.mxu0 %v440
    %v642 = vpop.f32.mrf.mxu0
    %v643 = vadd.f32 %v519, %v642
    %v644 = vpop.f32.mrf.mxu0
    %645 = vmatprep.mubr.f32.mxu0 %v443
    %646 = vmatmul.mubr.f32.gmra.mxu0 %v442
    %v647 = vpop.f32.mrf.mxu0
    %v648 = vadd.f32 %v519, %v647
    %v649 = vpop.f32.mrf.mxu0
    %650 = vmatprep.mubr.f32.mxu0 %v445
    %651 = vmatmul.mubr.f32.gmra.mxu0 %v444
    %v652 = vpop.f32.mrf.mxu0
    %v653 = vadd.f32 %v519, %v652
    %v654 = vpop.f32.mrf.mxu0
    %655 = vmatprep.mubr.f32.mxu0 %v447
    %656 = vmatmul.mubr.f32.gmra.mxu0 %v446
    %v657 = vpop.f32.mrf.mxu0
    %v658 = vadd.f32 %v519, %v657
    %v659 = vpop.f32.mrf.mxu0
    %660 = vmatprep.mubr.f32.mxu0 %v449
    %661 = vmatmul.mubr.f32.gmra.mxu0 %v448
    %v662 = vpop.f32.mrf.mxu0
    %v663 = vadd.f32 %v519, %v662
    %v664 = vpop.f32.mrf.mxu0
    %665 = vmatprep.mubr.f32.mxu0 %v451
    %666 = vmatmul.mubr.f32.gmra.mxu0 %v450
    %v667 = vpop.f32.mrf.mxu0
    %v668 = vadd.f32 %v519, %v667
    %v669 = vpop.f32.mrf.mxu0
    %670 = vmatprep.mubr.f32.mxu0 %v453
    %671 = vmatmul.mubr.f32.gmra.mxu0 %v452
    %v672 = vpop.f32.mrf.mxu0
    %v673 = vadd.f32 %v519, %v672
    %v674 = vpop.f32.mrf.mxu0
    %675 = vmatprep.mubr.f32.mxu0 %v455
    %676 = vmatmul.mubr.f32.gmra.mxu0 %v454
    %v677 = vpop.f32.mrf.mxu0
    %v678 = vadd.f32 %v519, %v677
    %v679 = vpop.f32.mrf.mxu0
    %680 = vmatprep.mubr.f32.mxu0 %v457
    %681 = vmatmul.mubr.f32.gmra.mxu0 %v456
    %v682 = vpop.f32.mrf.mxu0
    %v683 = vadd.f32 %v519, %v682
    %v684 = vpop.f32.mrf.mxu0
    %685 = vmatprep.mubr.f32.mxu0 %v459
    %686 = vmatmul.mubr.f32.gmra.mxu0 %v458
    %v687 = vpop.f32.mrf.mxu0
    %v688 = vadd.f32 %v519, %v687
    %v689 = vpop.f32.mrf.mxu0
    %690 = vmatprep.mubr.f32.mxu0 %v461
    %691 = vmatmul.mubr.f32.gmra.mxu0 %v460
    %v692 = vpop.f32.mrf.mxu0
    %v693 = vadd.f32 %v519, %v692
    %v694 = vpop.f32.mrf.mxu0
    %695 = vmatprep.mubr.f32.mxu0 %v463
    %696 = vmatmul.mubr.f32.gmra.mxu0 %v462
    %v697 = vpop.f32.mrf.mxu0
    %v698 = vadd.f32 %v519, %v697
    %v699 = vpop.f32.mrf.mxu0
    %700 = vmatprep.mubr.f32.mxu0 %v465
    %701 = vmatmul.mubr.f32.gmra.mxu0 %v464
    %v702 = vpop.f32.mrf.mxu0
    %v703 = vadd.f32 %v519, %v702
    %v704 = vpop.f32.mrf.mxu0
    %705 = vmatprep.mubr.f32.mxu0 %v467
    %706 = vmatmul.mubr.f32.gmra.mxu0 %v466
    %v707 = vpop.f32.mrf.mxu0
    %v708 = vadd.f32 %v519, %v707
    %v709 = vpop.f32.mrf.mxu0
    %710 = vmatprep.mubr.f32.mxu0 %v469
    %711 = vmatmul.mubr.f32.gmra.mxu0 %v468
    %v712 = vpop.f32.mrf.mxu0
    %v713 = vadd.f32 %v519, %v712
    %v714 = vpop.f32.mrf.mxu0
    %715 = vmatprep.mubr.f32.mxu0 %v471
    %716 = vmatmul.mubr.f32.gmra.mxu0 %v470
    %v717 = vpop.f32.mrf.mxu0
    %v718 = vadd.f32 %v519, %v717
    %v719 = vpop.f32.mrf.mxu0
    %720 = vmatprep.mubr.f32.mxu0 %v473
    %721 = vmatmul.mubr.f32.gmra.mxu0 %v472
    %v722 = vpop.f32.mrf.mxu0
    %v723 = vadd.f32 %v519, %v722
    %v724 = vpop.f32.mrf.mxu0
    %725 = vmatprep.mubr.f32.mxu0 %v475
    %726 = vmatmul.mubr.f32.gmra.mxu0 %v474
    %v727 = vpop.f32.mrf.mxu0
    %v728 = vadd.f32 %v519, %v727
    %v729 = vpop.f32.mrf.mxu0
    %730 = vmatprep.mubr.f32.mxu0 %v477
    %731 = vmatmul.mubr.f32.gmra.mxu0 %v476
    %v732 = vpop.f32.mrf.mxu0
    %v733 = vadd.f32 %v519, %v732
    %v734 = vpop.f32.mrf.mxu0
    %735 = vmatprep.mubr.f32.mxu0 %v479
    %736 = vmatmul.mubr.f32.gmra.mxu0 %v478
    %v737 = vpop.f32.mrf.mxu0
    %v738 = vadd.f32 %v519, %v737
    %v739 = vpop.f32.mrf.mxu0
    %740 = vmatprep.mubr.f32.mxu0 %v481
    %741 = vmatmul.mubr.f32.gmra.mxu0 %v480
    %v742 = vpop.f32.mrf.mxu0
    %v743 = vadd.f32 %v519, %v742
    %v744 = vpop.f32.mrf.mxu0
    %745 = vdwg.mxu0
    %746 = vst [vmem:[#allocation2] sm:$0xff] %v588
    %747 = vst [vmem:[#allocation2 + $0x8] sm:$0xff] %v593
    %748 = vst [vmem:[#allocation2 + $0x10] sm:$0xff] %v598
    %749 = vst [vmem:[#allocation2 + $0x18] sm:$0xff] %v603
    %750 = vst [vmem:[#allocation2 + $0x20] sm:$0xff] %v608
    %751 = vst [vmem:[#allocation2 + $0x28] sm:$0xff] %v613
    %752 = vst [vmem:[#allocation2 + $0x30] sm:$0xff] %v618
    %753 = vst [vmem:[#allocation2 + $0x38] sm:$0xff] %v623
    %754 = vst [vmem:[#allocation2 + $0x40] sm:$0xff] %v628
    %755 = vst [vmem:[#allocation2 + $0x48] sm:$0xff] %v633
    %756 = vst [vmem:[#allocation2 + $0x50] sm:$0xff] %v638
    %757 = vst [vmem:[#allocation2 + $0x58] sm:$0xff] %v643
    %758 = vst [vmem:[#allocation2 + $0x60] sm:$0xff] %v648
    %759 = vst [vmem:[#allocation2 + $0x68] sm:$0xff] %v653
    %760 = vst [vmem:[#allocation2 + $0x70] sm:$0xff] %v658
    %761 = vst [vmem:[#allocation2 + $0x78] sm:$0xff] %v663
    %762 = vst [vmem:[#allocation2 + $0x80] sm:$0xff] %v668
    %763 = vst [vmem:[#allocation2 + $0x88] sm:$0xff] %v673
    %764 = vst [vmem:[#allocation2 + $0x90] sm:$0xff] %v678
    %765 = vst [vmem:[#allocation2 + $0x98] sm:$0xff] %v683
    %766 = vst [vmem:[#allocation2 + $0xa0] sm:$0xff] %v688
    %767 = vst [vmem:[#allocation2 + $0xa8] sm:$0xff] %v693
    %768 = vst [vmem:[#allocation2 + $0xb0] sm:$0xff] %v698
    %769 = vst [vmem:[#allocation2 + $0xb8] sm:$0xff] %v703
    %770 = vst [vmem:[#allocation2 + $0xc0] sm:$0xff] %v708
    %771 = vst [vmem:[#allocation2 + $0xc8] sm:$0xff] %v713
    %772 = vst [vmem:[#allocation2 + $0xd0] sm:$0xff] %v718
    %773 = vst [vmem:[#allocation2 + $0xd8] sm:$0xff] %v723
    %774 = vst [vmem:[#allocation2 + $0xe0] sm:$0xff] %v728
    %775 = vst [vmem:[#allocation2 + $0xe8] sm:$0xff] %v733
    %776 = vst [vmem:[#allocation2 + $0xf0] sm:$0xff] %v738
    %777 = vst [vmem:[#allocation2 + $0xf8] sm:$0xff] %v743
    // Predicated region
    $region18: #{tpu_custom_call.1} parent=1 // pred_check
      _
    $region19: #{tpu_custom_call.1} parent=1 // pred_check_branch
      %779 = sbr.rel (0) target = $region21
    $region20: #{tpu_custom_call.1} parent=1 // pred_region
      %s781 = ssub.s32 4096, 4096
      %782 = vsyncadd [#allocation3], %s781
      %s783 = sshll.u32 [#allocation2], 4
      %s784 = int_to_ptr.vmem [resolvable:$true] %s783
      %789 = dma.vmem_to_hbm [thread:$0]  %s784, 4096, %s4, [#allocation3], 128, 128, 8
    $region21: #{tpu_custom_call.1} parent=1 // pred_fallthru
      _
    // Predicated region
    $region22: #{tpu_custom_call.1} parent=1 // pred_check
      _
    $region23: #{tpu_custom_call.1} parent=1 // pred_check_branch
      %791 = sbr.rel (0) target = $region25
    $region24: #{tpu_custom_call.1} parent=1 // pred_region
      %792 = dma.done [#allocation3], 4096
    $region25: #{tpu_custom_call.1} parent=1 // pred_fallthru
      _
    %793 = vsyncpa [#allocation3], 1

</llo_original>
